<compile_context>
chip_gen: v6e
topology: v6e:2x2x1
jax: 0.10.0
libtpu: 0.0.40
codegen_flags: <defaults>
</compile_context>

<pallas_src>
import functools

import jax
import jax.numpy as jnp
import numpy as np
from jax import lax
from jax.experimental import pallas as pl
from jax.experimental.pallas import tpu as pltpu


def _largest_divisor_tile(total, target, mult):
    """Largest t <= target with t % mult == 0 and total % t == 0; else total."""
    t = (min(target, total) // mult) * mult
    while t >= mult:
        if total % t == 0:
            return t
        t -= mult
    return total


# ----------------------------------------------------------------------------
# Fused kernel: masked mean pooling over S  +  Mahalanobis scoring.
# Grid = (B/tb, S/ts); S is the trailing ("arbitrary") reduction axis.
# ----------------------------------------------------------------------------
def _fused_pool_score_kernel(h_ref, m_ref, den_ref, mu_ref, cov_ref, qmu_ref,
                             prelogits_ref, scores_ref, acc_ref,
                             *, use_bf16_matmul):
    s = pl.program_id(1)
    ns = pl.num_programs(1)

    @pl.when(s == 0)
    def _init():
        acc_ref[...] = jnp.zeros_like(acc_ref)

    # --- streaming masked sum over the current S tile, on the MXU -----------
    #   acc[b, 0, h] += sum_s mask[b, 0, s] * hidden[b, s, h]
    # Operands stay in their storage dtype (bf16 feeds the MXU directly);
    # accumulation is f32 via preferred_element_type -> no f32 upcast of h.
    acc_ref[...] += lax.dot_general(
        m_ref[...], h_ref[...],
        dimension_numbers=(((2,), (1,)), ((0,), (0,))),
        preferred_element_type=jnp.float32)                      # [tb, 1, H]

    # --- finalize: prelogits + expanded Mahalanobis scores -------------------
    @pl.when(s == ns - 1)
    def _finalize():
        pre = acc_ref[...][:, 0, :] / den_ref[...]               # [tb, H] f32
        prelogits_ref[...] = pre.astype(prelogits_ref.dtype)

        mm_dtype = jnp.bfloat16 if use_bf16_matmul else jnp.float32
        cov = cov_ref[...].astype(mm_dtype)                      # [H, H] (resident)
        mu = mu_ref[...].astype(mm_dtype)                        # [L, H] (resident)

        xC = jnp.dot(pre.astype(mm_dtype), cov,
                     preferred_element_type=jnp.float32)         # [tb, H]
        q_x = jnp.sum(xC * pre, axis=-1, keepdims=True)          # [tb, 1]
        # cross[b, l] = (x_b C) . mu_l  -- contract H of both operands, no .T
        cross = lax.dot_general(
            xC.astype(mm_dtype), mu,
            dimension_numbers=(((1,), (1,)), ((), ())),
            preferred_element_type=jnp.float32)                  # [tb, L]
        # score[b, l] = (x_b - mu_l) C (x_b - mu_l) = q_x + q_mu - 2*cross
        scores_ref[...] = qmu_ref[...] + q_x - 2.0 * cross       # [tb, L] lane-dense


def fused_pool_and_score(last_hidden_state, attention_mask, task_means, cov_inv,
                         q_mu=None, *, tb=None, ts=None, use_bf16_matmul=False):
    """Returns (prelogits [B,H] f32, scores [B,L] f32)."""
    B, S, H = last_hidden_state.shape
    L, Hm = task_means.shape
    assert Hm == H, "class means hidden size mismatch"

    # cov_inv from torch.linalg.pinv(..., hermitian=True) is symmetric; the
    # symmetrization makes the expanded quadratic form exact for a slightly
    # asymmetric input.  cov_sym / q_mu are static statistics (new_statistic()).
    cov_sym = (0.5 * (cov_inv + cov_inv.T)).astype(jnp.float32)
    mu32 = task_means.astype(jnp.float32)
    if q_mu is None:
        q_mu = jnp.sum((mu32 @ cov_sym) * mu32, axis=-1)
    q_mu = q_mu.reshape(1, L).astype(jnp.float32)

    # Static per-row denominator (was recomputed every S tile before).
    mask_f32 = attention_mask.astype(jnp.float32)
    den = jnp.maximum(jnp.sum(mask_f32, axis=-1, keepdims=True), 1e-9)   # [B, 1]
    # Lane-dense mask for the batched MXU dot; 0/1 is exact in bf16.
    mask3 = mask_f32.reshape(B, 1, S).astype(last_hidden_state.dtype)    # [B, 1, S]

    # --- generation-aware tiling / VMEM plan ---------------------------------
    try:
        vmem_cap = int(pltpu.get_tpu_info().vmem_capacity_bytes)
    except Exception:
        vmem_cap = 64 << 20                      # conservative (v7x per-TC)
    big_vmem = vmem_cap >= (100 << 20)           # v5e / v6e: 128 MiB physical
    hidden_block_target = (6 << 20) if big_vmem else (3 << 20)
    vmem_cap_limit = (100 << 20) if big_vmem else (48 << 20)

    if tb is None:
        # Keep B//tb >= 2 for megacore sharding when B is large enough; the
        # sublane rule needs tb % 8 == 0 or tb == B.
        tb = B if B <= 8 else _largest_divisor_tile(B, max(8, min(256, B // 2)), 8)
    it_h = jnp.dtype(last_hidden_state.dtype).itemsize
    if ts is None:
        if S % 128 != 0:
            ts = S                                # full-extent block is always legal
        else:
            rows = max(128, hidden_block_target // max(1, tb * H * it_h))
            ts = _largest_divisor_tile(S, rows, 128)
    assert B % tb == 0 and S % ts == 0

    # Resident statistics: f32 by default; bf16 when explicitly requested or
    # when H is large enough that an f32 cov would crowd v7x's 64 MiB VMEM.
    res_dtype = (jnp.bfloat16 if (use_bf16_matmul or (not big_vmem and H >= 2048))
                 else jnp.float32)
    mu_res = task_means.astype(res_dtype)
    cov_res = cov_sym.astype(res_dtype)
    res_it = jnp.dtype(res_dtype).itemsize

    # VMEM budget (double buffers for streamed inputs, resident params, outputs,
    # scratch) with padding accounted for; capped per generation.
    Lp8 = ((L + 7) // 8) * 8
    Lp128 = ((L + 127) // 128) * 128
    est = (2 * tb * ts * H * it_h                 # hidden (double-buffered)
           + 2 * tb * 8 * ts * it_h               # mask [tb,1,ts] (sublane 1->8 pad)
           + 2 * (Lp8 * H + H * H) * res_it       # resident class means + cov_inv
           + 2 * (8 * Lp128 + tb * 128) * 4       # q_mu + den (lane padded)
           + 2 * (tb * H + tb * Lp128) * 4        # outputs (prelogits, scores)
           + tb * 8 * H * 4)                      # accumulator scratch
    vmem_limit = int(min(max(2 * est, 16 << 20), vmem_cap_limit))

    kernel = functools.partial(_fused_pool_score_kernel,
                               use_bf16_matmul=use_bf16_matmul)

    prelogits, scores_bl = pl.pallas_call(
        kernel,
        out_shape=(
            jax.ShapeDtypeStruct((B, H), jnp.float32),
            jax.ShapeDtypeStruct((B, L), jnp.float32),
        ),
        grid_spec=pltpu.PrefetchScalarGridSpec(
            num_scalar_prefetch=0,
            grid=(B // tb, S // ts),
            in_specs=[
                pl.BlockSpec((tb, ts, H), lambda b, s: (b, s, 0)),   # hidden (streamed)
                pl.BlockSpec((tb, 1, ts), lambda b, s: (b, 0, s)),   # mask (streamed, lane-dense)
                pl.BlockSpec((tb, 1), lambda b, s: (b, 0)),          # per-row denominator
                pl.BlockSpec((L, H), lambda b, s: (0, 0)),           # class means (resident)
                pl.BlockSpec((H, H), lambda b, s: (0, 0)),           # cov_inv (resident)
                pl.BlockSpec((1, L), lambda b, s: (0, 0)),           # q_mu (resident)
            ],
            out_specs=(
                pl.BlockSpec((tb, H), lambda b, s: (b, 0)),          # prelogits
                pl.BlockSpec((tb, L), lambda b, s: (b, 0)),          # scores [B, L] lane-dense
            ),
            scratch_shapes=[
                pltpu.VMEM((tb, 1, H), jnp.float32),                 # masked-sum accumulator
            ],
        ),
        compiler_params=pltpu.CompilerParams(
            dimension_semantics=("parallel", "arbitrary"),
            vmem_limit_bytes=vmem_limit),
    )(last_hidden_state, mask3, den, mu_res, cov_res, q_mu)
    return prelogits, scores_bl


# ----------------------------------------------------------------------------
# Full forward (functional equivalent of NonParameteric.forward,
# query_mode == 'mahalanobis', reduce_dim_mode == 'none')
# ----------------------------------------------------------------------------
def non_parameteric_forward(last_hidden_state, attention_mask, task_means, cov_inv,
                            get_prelogits=False, q_mu=None, use_bf16_matmul=False):
    # TODO(synk): the HuggingFace AutoModel transformer backbone (and the optional
    # sklearn PCA / mask dim-reduction paths) have no clean Pallas equivalent here;
    # `last_hidden_state` is taken as input.
    prelogits, scores_bl = fused_pool_and_score(
        last_hidden_state, attention_mask, task_means, cov_inv,
        q_mu=q_mu, use_bf16_matmul=use_bf16_matmul)
    if get_prelogits:
        return prelogits
    # Module layout: scores_over_tasks is [L, B]; torch.min(dim=0) -> first index.
    preds = jnp.argmin(scores_bl, axis=-1)          # first-occurrence tie-break
    scores = scores_bl.T                            # [L, B]
    return preds, scores


if __name__ == "__main__":
    key = jax.random.PRNGKey(0)
    k_h, k_m1, k_cov = jax.random.split(key, 3)

    B, S, H = 8, 16, 128         # batch, seq, hidden_size (config.hidden_size)
    # Two tasks with 3 and 5 labels -> 8 class means total (concatenated)
    L = 3 + 5

    # Synthetic backbone output (stands in for AutoModel(...).last_hidden_state),
    # in bf16 to halve HBM traffic; the MXU widens to f32 internally.
    last_hidden_state = jax.random.normal(k_h, (B, S, H), dtype=jnp.float32
                                          ).astype(jnp.bfloat16)
    # Ragged attention mask (first half full length, second half half length)
    lens = np.array([S, S, S, S, S // 2, S // 2, S // 2, S // 2])
    attention_mask = jnp.asarray(
        (np.arange(S)[None, :] < lens[:, None]).astype(np.float32))

    # Deterministic "statistics" (what new_statistic would have stored)
    task_means = jax.random.normal(k_m1, (L, H), dtype=jnp.float32) * 0.5
    A = jax.random.normal(k_cov, (H, H), dtype=jnp.float32) * 0.05
    cov_inv = A @ A.T + jnp.eye(H, dtype=jnp.float32)   # symmetric PSD (pinv hermitian)

    preds, scores = non_parameteric_forward(
        last_hidden_state, attention_mask, task_means, cov_inv)
    preds = jax.block_until_ready(preds)
    scores = jax.block_until_ready(scores)
    prelogits = jax.block_until_ready(non_parameteric_forward(
        last_hidden_state, attention_mask, task_means, cov_inv, get_prelogits=True))

    # --- reference check in plain JAX (f32, same upcast as the kernel) ---
    h32 = last_hidden_state.astype(jnp.float32)
    num = jnp.sum(h32 * attention_mask[:, :, None], axis=1)
    den = jnp.maximum(jnp.sum(attention_mask, axis=1, keepdims=True), 1e-9)
    ref_prelogits = num / den
    diff = ref_prelogits[None, :, :] - task_means[:, None, :]           # [L, B, H]
    ref_scores = jnp.einsum("lbh,hk,lbk->lb", diff, cov_inv, diff)      # [L, B]
    ref_preds = jnp.argmin(ref_scores, axis=0)

    np.testing.assert_allclose(np.asarray(prelogits), np.asarray(ref_prelogits),
                               rtol=1e-5, atol=1e-5)
    np.testing.assert_allclose(np.asarray(scores), np.asarray(ref_scores),
                               rtol=1e-4, atol=1e-3)
    np.testing.assert_array_equal(np.asarray(preds), np.asarray(ref_preds))

    print("KERNEL_OK")
</pallas_src>

<mosaic_0001>
module attributes {stable_mosaic.version = 11 : i64} {
  func.func @_fused_pool_score_kernel(%arg0: i32, %arg1: i32, %arg2: memref<8x16x128xbf16, #tpu.memory_space<vmem>>, %arg3: memref<8x1x16xbf16, #tpu.memory_space<vmem>>, %arg4: memref<8x1xf32, #tpu.memory_space<vmem>>, %arg5: memref<8x128xf32, #tpu.memory_space<vmem>>, %arg6: memref<128x128xf32, #tpu.memory_space<vmem>>, %arg7: memref<1x8xf32, #tpu.memory_space<vmem>>, %arg8: memref<8x128xf32, #tpu.memory_space<vmem>>, %arg9: memref<8x8xf32, #tpu.memory_space<vmem>>, %arg10: memref<8x1x128xf32, #tpu.memory_space<vmem>>) attributes {dimension_semantics = [#tpu.dimension_semantics<parallel>, #tpu.dimension_semantics<arbitrary>], iteration_bounds = array<i64: 1, 1>, scalar_prefetch = 0 : i64, scratch_operands = 1 : i64, tpu.core_type = #tpu.core_type<tc>, window_params = [{transform_indices = @transform_0, window_bounds = array<i64: 8, 16, 128>}, {transform_indices = @transform_1, window_bounds = array<i64: 8, 1, 16>}, {transform_indices = @transform_2, window_bounds = array<i64: 8, 1>}, {pipeline_mode = #tpu.pipeline_mode<synchronous>, transform_indices = @transform_3, window_bounds = array<i64: 8, 128>}, {pipeline_mode = #tpu.pipeline_mode<synchronous>, transform_indices = @transform_4, window_bounds = array<i64: 128, 128>}, {pipeline_mode = #tpu.pipeline_mode<synchronous>, transform_indices = @transform_5, window_bounds = array<i64: 1, 8>}, {transform_indices = @transform_6, window_bounds = array<i64: 8, 128>}, {transform_indices = @transform_7, window_bounds = array<i64: 8, 8>}]} {
    %c0_i32 = arith.constant 0 : i32
    %0 = arith.cmpi eq, %arg1, %c0_i32 : i32
    %1 = arith.extui %0 : i1 to i32
    %c0_i32_0 = arith.constant 0 : i32
    %2 = arith.cmpi ne, %1, %c0_i32_0 : i32
    scf.if %2 {
      %cst_14 = arith.constant 0.000000e+00 : f32
      %12 = vector.broadcast %cst_14 : f32 to vector<8x1x128xf32>
      %c0_15 = arith.constant 0 : index
      %c0_16 = arith.constant 0 : index
      %c0_17 = arith.constant 0 : index
      %13 = vector.load %arg10[%c0_15, %c0_16, %c0_17] : memref<8x1x128xf32, #tpu.memory_space<vmem>>, vector<8x1x128xf32>
      tpu.vector_store %arg10[%c0_15, %c0_16, %c0_17], %12 {strides = array<i32>} : memref<8x1x128xf32, #tpu.memory_space<vmem>>, vector<8x1x128xf32>,
    } else {
    }
    %c0 = arith.constant 0 : index
    %c0_1 = arith.constant 0 : index
    %c0_2 = arith.constant 0 : index
    %3 = vector.load %arg10[%c0, %c0_1, %c0_2] : memref<8x1x128xf32, #tpu.memory_space<vmem>>, vector<8x1x128xf32>
    %c0_3 = arith.constant 0 : index
    %c0_4 = arith.constant 0 : index
    %c0_5 = arith.constant 0 : index
    %4 = vector.load %arg3[%c0_3, %c0_4, %c0_5] : memref<8x1x16xbf16, #tpu.memory_space<vmem>>, vector<8x1x16xbf16>
    %c0_6 = arith.constant 0 : index
    %c0_7 = arith.constant 0 : index
    %c0_8 = arith.constant 0 : index
    %5 = vector.load %arg2[%c0_6, %c0_7, %c0_8] : memref<8x16x128xbf16, #tpu.memory_space<vmem>>, vector<8x16x128xbf16>
    %cst = arith.constant dense<0.000000e+00> : vector<8x1x128xf32>
    %6 = tpu.matmul %4, %5, %cst {dimension_numbers = #tpu.dot_dimension_numbers<[2], [1], [1], [2], [0, 0, 0, 1, 1, 2], [0], [0]>} : vector<8x1x16xbf16>, vector<8x16x128xbf16>, vector<8x1x128xf32> -> vector<8x1x128xf32>
    %7 = arith.addf %3, %6 : vector<8x1x128xf32>
    %c0_9 = arith.constant 0 : index
    %c0_10 = arith.constant 0 : index
    %c0_11 = arith.constant 0 : index
    %8 = vector.load %arg10[%c0_9, %c0_10, %c0_11] : memref<8x1x128xf32, #tpu.memory_space<vmem>>, vector<8x1x128xf32>
    tpu.vector_store %arg10[%c0_9, %c0_10, %c0_11], %7 {strides = array<i32>} : memref<8x1x128xf32, #tpu.memory_space<vmem>>, vector<8x1x128xf32>,
    %c0_i32_12 = arith.constant 0 : i32
    %9 = arith.cmpi eq, %arg1, %c0_i32_12 : i32
    %10 = arith.extui %9 : i1 to i32
    %c0_i32_13 = arith.constant 0 : i32
    %11 = arith.cmpi ne, %10, %c0_i32_13 : i32
    scf.if %11 {
      %c0_14 = arith.constant 0 : index
      %c0_15 = arith.constant 0 : index
      %c0_16 = arith.constant 0 : index
      %12 = vector.load %arg10[%c0_14, %c0_15, %c0_16] : memref<8x1x128xf32, #tpu.memory_space<vmem>>, vector<8x1x128xf32>
      %13 = vector.shape_cast %12 : vector<8x1x128xf32> to vector<8x128xf32>
      %c0_17 = arith.constant 0 : index
      %c0_18 = arith.constant 0 : index
      %14 = vector.load %arg4[%c0_17, %c0_18] : memref<8x1xf32, #tpu.memory_space<vmem>>, vector<8x1xf32>
      %15 = vector.broadcast %14 : vector<8x1xf32> to vector<8x128xf32>
      %16 = arith.divf %13, %15 : vector<8x128xf32>
      %c0_19 = arith.constant 0 : index
      %c0_20 = arith.constant 0 : index
      %17 = vector.load %arg8[%c0_19, %c0_20] : memref<8x128xf32, #tpu.memory_space<vmem>>, vector<8x128xf32>
      tpu.vector_store %arg8[%c0_19, %c0_20], %16 {strides = array<i32>} : memref<8x128xf32, #tpu.memory_space<vmem>>, vector<8x128xf32>,
      %c0_21 = arith.constant 0 : index
      %c0_22 = arith.constant 0 : index
      %18 = vector.load %arg6[%c0_21, %c0_22] : memref<128x128xf32, #tpu.memory_space<vmem>>, vector<128x128xf32>
      %c0_23 = arith.constant 0 : index
      %c0_24 = arith.constant 0 : index
      %19 = vector.load %arg5[%c0_23, %c0_24] : memref<8x128xf32, #tpu.memory_space<vmem>>, vector<8x128xf32>
      %cst_25 = arith.constant dense<0.000000e+00> : vector<8x128xf32>
      %20 = tpu.matmul %16, %18, %cst_25 {dimension_numbers = #tpu.dot_dimension_numbers<[1], [0], [0], [1], [0, 0, 1, 1], [], []>} : vector<8x128xf32>, vector<128x128xf32>, vector<8x128xf32> -> vector<8x128xf32>
      %21 = arith.mulf %20, %16 : vector<8x128xf32>
      %cst_26 = arith.constant dense<0.000000e+00> : vector<8xf32>
      %22 = vector.multi_reduction <add>, %21, %cst_26 [1] : vector<8x128xf32> to vector<8xf32>
      %23 = vector.shape_cast %22 : vector<8xf32> to vector<8x1xf32>
      %cst_27 = arith.constant dense<0.000000e+00> : vector<8x8xf32>
      %24 = tpu.matmul %20, %19, %cst_27 {dimension_numbers = #tpu.dot_dimension_numbers<[1], [1], [0], [0], [0, 0, 1, 0], [], []>} : vector<8x128xf32>, vector<8x128xf32>, vector<8x8xf32> -> vector<8x8xf32>
      %c0_28 = arith.constant 0 : index
      %c0_29 = arith.constant 0 : index
      %25 = vector.load %arg7[%c0_28, %c0_29] : memref<1x8xf32, #tpu.memory_space<vmem>>, vector<1x8xf32>
      %26 = vector.broadcast %25 : vector<1x8xf32> to vector<8x8xf32>
      %27 = vector.broadcast %23 : vector<8x1xf32> to vector<8x8xf32>
      %28 = arith.addf %26, %27 : vector<8x8xf32>
      %cst_30 = arith.constant 2.000000e+00 : f32
      %29 = vector.broadcast %cst_30 : f32 to vector<8x8xf32>
      %30 = arith.mulf %29, %24 : vector<8x8xf32>
      %31 = arith.subf %28, %30 : vector<8x8xf32>
      %c0_31 = arith.constant 0 : index
      %c0_32 = arith.constant 0 : index
      %32 = vector.load %arg9[%c0_31, %c0_32] : memref<8x8xf32, #tpu.memory_space<vmem>>, vector<8x8xf32>
      tpu.vector_store %arg9[%c0_31, %c0_32], %31 {strides = array<i32>} : memref<8x8xf32, #tpu.memory_space<vmem>>, vector<8x8xf32>,
    } else {
    }
    return
  }
  func.func @transform_0(%arg0: i32, %arg1: i32) -> (i32, i32, i32) {
    %c0_i32 = arith.constant 0 : i32
    %c0_i32_0 = arith.constant 0 : i32
    return %arg0, %arg1, %c0_i32 : i32, i32, i32
  }
  func.func @transform_1(%arg0: i32, %arg1: i32) -> (i32, i32, i32) {
    %c0_i32 = arith.constant 0 : i32
    %c0_i32_0 = arith.constant 0 : i32
    return %arg0, %c0_i32, %arg1 : i32, i32, i32
  }
  func.func @transform_2(%arg0: i32, %arg1: i32) -> (i32, i32) {
    %c0_i32 = arith.constant 0 : i32
    %c0_i32_0 = arith.constant 0 : i32
    return %arg0, %c0_i32 : i32, i32
  }
  func.func @transform_3(%arg0: i32, %arg1: i32) -> (i32, i32) {
    %c0_i32 = arith.constant 0 : i32
    %c0_i32_0 = arith.constant 0 : i32
    %c0_i32_1 = arith.constant 0 : i32
    return %c0_i32, %c0_i32_0 : i32, i32
  }
  func.func @transform_4(%arg0: i32, %arg1: i32) -> (i32, i32) {
    %c0_i32 = arith.constant 0 : i32
    %c0_i32_0 = arith.constant 0 : i32
    %c0_i32_1 = arith.constant 0 : i32
    return %c0_i32, %c0_i32_0 : i32, i32
  }
  func.func @transform_5(%arg0: i32, %arg1: i32) -> (i32, i32) {
    %c0_i32 = arith.constant 0 : i32
    %c0_i32_0 = arith.constant 0 : i32
    %c0_i32_1 = arith.constant 0 : i32
    return %c0_i32, %c0_i32_0 : i32, i32
  }
  func.func @transform_6(%arg0: i32, %arg1: i32) -> (i32, i32) {
    %c0_i32 = arith.constant 0 : i32
    %c0_i32_0 = arith.constant 0 : i32
    return %arg0, %c0_i32 : i32, i32
  }
  func.func @transform_7(%arg0: i32, %arg1: i32) -> (i32, i32) {
    %c0_i32 = arith.constant 0 : i32
    %c0_i32_0 = arith.constant 0 : i32
    return %arg0, %c0_i32 : i32, i32
  }
}

</mosaic_0001>

<llo_original>
// kernel: tpu_custom_call.1
$region0: #{tpu_custom_call.1}
  #allocation0 [shape = 'u32[]', space=smem, size = 0x4, offset = 0x4, fixed_abs, tag = 'smem constant byte address 0x4 - core index']
  #allocation1 [shape = 'u32[144,128]{1,0:T(1,128)}', space=vmem, size = 0x12000, scoped, tag = 'internal scratch']
  #allocation2 [shape = 'f32[8,1,128]{2,1,0:T(1,128)}', space=vmem, size = 0x1000, scoped, tag = 'scratch operand']
  %s0 = inlined_call_operand.hbm [shape: bf16[8,16,128], index: 0, kind: input, shape index: {}]
  %s1 = inlined_call_operand.vmem [shape: bf16[8,1,16], index: 1, kind: input, shape index: {}]
  %s2 = inlined_call_operand.vmem [shape: f32[8,1], index: 2, kind: input, shape index: {}]
  %s3 = inlined_call_operand.vmem [shape: f32[8,128], index: 3, kind: input, shape index: {}]
  %s4 = inlined_call_operand.hbm [shape: f32[128,128], index: 4, kind: input, shape index: {}]
  %s5 = inlined_call_operand.vmem [shape: f32[1,8], index: 5, kind: input, shape index: {}]
  %s6 = inlined_call_operand.hbm [shape: f32[8,128], index: 6, kind: output, shape index: {0}]
  %s7 = inlined_call_operand.hbm [shape: f32[8,8], index: 7, kind: output, shape index: {1}]
  %8 = xla_tuple %s6, %s7
  %s9 = sld [smem:[#allocation0]]
  $region58: #{tpu_custom_call.1} parent=0
    _
  %s11 = ssub.s32 1, %s9
  %s12 = scalar_select 0, %s11, %s9
  $region1: #{tpu_custom_call.1} parent=0
    #allocation3 [shape = 'u8[32768]{0}', space=vmem, size = 0x8000, scoped, tag = 'input window, operand 0, single buffered']
    #allocation4 [shape = 's32[1]{0}', space=sflag, size = 0x4, scoped, tag = 'scoped memory for tpu_custom_call.1']
    #allocation5 [shape = 's32[1]{0}', space=sflag, size = 0x4, scoped, tag = 'scoped memory for tpu_custom_call.1']
    #allocation6 [shape = 'u8[65536]{0}', space=vmem, size = 0x10000, scoped, tag = 'input window, operand 4, single buffered']
    #allocation7 [shape = 's32[1]{0}', space=sflag, size = 0x4, scoped, tag = 'scoped memory for tpu_custom_call.1']
    #allocation8 [shape = 'u8[4096]{0}', space=vmem, size = 0x1000, scoped, tag = 'output window, operand 0, single buffered']
    #allocation9 [shape = 'u8[4096]{0}', space=vmem, size = 0x1000, scoped, tag = 'output window, operand 1, single buffered']
    #allocation10 [shape = 's32[1]{0}', space=sflag, size = 0x4, scoped, tag = 'scoped memory for tpu_custom_call.1']
    %13 = vsyncpa [#allocation4], 0
    %14 = vsyncpa [#allocation7], 0
    %15 = vsyncpa [#allocation5], 0
    %16 = vsyncpa [#allocation10], 0
    // Predicated region
    $region2: #{tpu_custom_call.1} parent=1 // pred_check
      _
    $region3: #{tpu_custom_call.1} parent=1 // pred_check_branch
      %18 = sbr.rel (0) target = $region5
    $region4: #{tpu_custom_call.1} parent=1 // pred_region
      %s20 = ssub.s32 1024, 1024
      %21 = vsyncadd [#allocation4], %s20
      %s22 = sshll.u32 [#allocation3], 4
      %s23 = int_to_ptr.vmem [resolvable:$true] %s22
      %28 = dma.hbm_to_vmem [thread:$0]  %s0, 1024, %s23, [#allocation4], 64, 64, 4
    $region5: #{tpu_custom_call.1} parent=1 // pred_fallthru
      _
    // Predicated region
    $region6: #{tpu_custom_call.1} parent=1 // pred_check
      _
    $region7: #{tpu_custom_call.1} parent=1 // pred_check_branch
      %30 = sbr.rel (0) target = $region9
    $region8: #{tpu_custom_call.1} parent=1 // pred_region
      _
    $region9: #{tpu_custom_call.1} parent=1 // pred_fallthru
      _
    // Predicated region
    $region10: #{tpu_custom_call.1} parent=1 // pred_check
      _
    $region11: #{tpu_custom_call.1} parent=1 // pred_check_branch
      %32 = sbr.rel (0) target = $region13
    $region12: #{tpu_custom_call.1} parent=1 // pred_region
      _
    $region13: #{tpu_custom_call.1} parent=1 // pred_fallthru
      _
    // Predicated region
    $region14: #{tpu_custom_call.1} parent=1 // pred_check
      _
    $region15: #{tpu_custom_call.1} parent=1 // pred_check_branch
      %34 = sbr.rel (0) target = $region17
    $region16: #{tpu_custom_call.1} parent=1 // pred_region
      _
    $region17: #{tpu_custom_call.1} parent=1 // pred_fallthru
      _
    // Predicated region
    $region18: #{tpu_custom_call.1} parent=1 // pred_check
      _
    $region19: #{tpu_custom_call.1} parent=1 // pred_check_branch
      %36 = sbr.rel (0) target = $region21
    $region20: #{tpu_custom_call.1} parent=1 // pred_region
      %s38 = ssub.s32 2048, 2048
      %39 = vsyncadd [#allocation7], %s38
      %s40 = sshll.u32 [#allocation6], 4
      %s41 = int_to_ptr.vmem [resolvable:$true] %s40
      %46 = dma.hbm_to_vmem [thread:$0]  %s4, 2048, %s41, [#allocation7], 128, 128, 8
    $region21: #{tpu_custom_call.1} parent=1 // pred_fallthru
      _
    // Predicated region
    $region22: #{tpu_custom_call.1} parent=1 // pred_check
      _
    $region23: #{tpu_custom_call.1} parent=1 // pred_check_branch
      %48 = sbr.rel (0) target = $region25
    $region24: #{tpu_custom_call.1} parent=1 // pred_region
      _
    $region25: #{tpu_custom_call.1} parent=1 // pred_fallthru
      _
    // Predicated region
    $region26: #{tpu_custom_call.1} parent=1 // pred_check
      _
    $region27: #{tpu_custom_call.1} parent=1 // pred_check_branch
      %50 = sbr.rel (0) target = $region29
    $region28: #{tpu_custom_call.1} parent=1 // pred_region
      %51 = dma.done [#allocation4], 1024
    $region29: #{tpu_custom_call.1} parent=1 // pred_fallthru
      _
    // Predicated region
    $region30: #{tpu_custom_call.1} parent=1 // pred_check
      _
    $region31: #{tpu_custom_call.1} parent=1 // pred_check_branch
      %53 = sbr.rel (0) target = $region33
    $region32: #{tpu_custom_call.1} parent=1 // pred_region
      %54 = dma.done [#allocation7], 2048
    $region33: #{tpu_custom_call.1} parent=1 // pred_fallthru
      _
    %p56 = scmp.eq.s32.totalorder 0, 0
    // Predicated region
    $region34: #{tpu_custom_call.1} parent=1 // pred_check
      %p57 = pneg %p56
    $region35: #{tpu_custom_call.1} parent=1 // pred_check_branch
      %59 = sbr.rel (%p57) target = $region37
    $region36: #{tpu_custom_call.1} parent=1 // pred_region
      %60 = vst [vmem:[#allocation2] sm:$0x1] 0.0
      %61 = vst [vmem:[#allocation2 + $0x1] sm:$0x1] 0.0
      %62 = vst [vmem:[#allocation2 + $0x2] sm:$0x1] 0.0
      %63 = vst [vmem:[#allocation2 + $0x3] sm:$0x1] 0.0
      %64 = vst [vmem:[#allocation2 + $0x4] sm:$0x1] 0.0
      %65 = vst [vmem:[#allocation2 + $0x5] sm:$0x1] 0.0
      %66 = vst [vmem:[#allocation2 + $0x6] sm:$0x1] 0.0
      %67 = vst [vmem:[#allocation2 + $0x7] sm:$0x1] 0.0
    $region37: #{tpu_custom_call.1} parent=1 // pred_fallthru
      _
    %v68 = vld [vmem:[#allocation2] sm:$0x1]
    %v69 = vld [vmem:[#allocation2 + $0x1] sm:$0x1]
    %v70 = vld [vmem:[#allocation2 + $0x2] sm:$0x1]
    %v71 = vld [vmem:[#allocation2 + $0x3] sm:$0x1]
    %v72 = vld [vmem:[#allocation2 + $0x4] sm:$0x1]
    %v73 = vld [vmem:[#allocation2 + $0x5] sm:$0x1]
    %v74 = vld [vmem:[#allocation2 + $0x6] sm:$0x1]
    %v75 = vld [vmem:[#allocation2 + $0x7] sm:$0x1]
    %v76 = vld [vmem:[%s1] sm:$0x1]
    %v77 = vld [vmem:[%s1 + $0x1] sm:$0x1]
    %v78 = vld [vmem:[%s1 + $0x2] sm:$0x1]
    %v79 = vld [vmem:[%s1 + $0x3] sm:$0x1]
    %v80 = vld [vmem:[%s1 + $0x4] sm:$0x1]
    %v81 = vld [vmem:[%s1 + $0x5] sm:$0x1]
    %v82 = vld [vmem:[%s1 + $0x6] sm:$0x1]
    %v83 = vld [vmem:[%s1 + $0x7] sm:$0x1]
    %v84 = vld [vmem:[#allocation3] sm:$0xf]
    %v85 = vld [vmem:[#allocation3 + $0x4] sm:$0xf]
    %v86 = vld [vmem:[#allocation3 + $0x8] sm:$0xf]
    %v87 = vld [vmem:[#allocation3 + $0xc] sm:$0xf]
    %v88 = vld [vmem:[#allocation3 + $0x10] sm:$0xf]
    %v89 = vld [vmem:[#allocation3 + $0x14] sm:$0xf]
    %v90 = vld [vmem:[#allocation3 + $0x18] sm:$0xf]
    %v91 = vld [vmem:[#allocation3 + $0x1c] sm:$0xf]
    %v92 = vld [vmem:[#allocation3 + $0x20] sm:$0xf]
    %v93 = vld [vmem:[#allocation3 + $0x24] sm:$0xf]
    %v94 = vld [vmem:[#allocation3 + $0x28] sm:$0xf]
    %v95 = vld [vmem:[#allocation3 + $0x2c] sm:$0xf]
    %v96 = vld [vmem:[#allocation3 + $0x30] sm:$0xf]
    %v97 = vld [vmem:[#allocation3 + $0x34] sm:$0xf]
    %v98 = vld [vmem:[#allocation3 + $0x38] sm:$0xf]
    %v99 = vld [vmem:[#allocation3 + $0x3c] sm:$0xf]
    %v102 = vunpack.c.l.b16 %v84
    %v103 = vunpack.c.l.b16 %v85
    %v104 = vpack.c.b16 %v103, %v102
    %vm106 = vcmask 130048
    %v108 = vsel %vm106, %v76, 0
    %110 = vmatprep.subr.bf16.mxu0 0
    %111 = vmatpush1.bf16.msra.mxu0 0
    %112 = vmatprep.subr.bf16.mxu0 0
    %113 = vmatpush1.bf16.msra.mxu0 0
    %114 = vmatprep.subr.bf16.mxu0 0
    %115 = vmatpush1.bf16.msra.mxu0 0
    %116 = vmatprep.subr.bf16.mxu0 0
    %117 = vmatpush1.bf16.msra.mxu0 0
    %118 = vmatprep.subr.bf16.mxu0 0
    %119 = vmatpush1.bf16.msra.mxu0 0
    %120 = vmatprep.subr.bf16.mxu0 0
    %121 = vmatpush1.bf16.msra.mxu0 0
    %122 = vmatprep.subr.bf16.mxu0 0
    %123 = vmatpush1.bf16.msra.mxu0 0
    %124 = vmatprep.subr.bf16.mxu0 0
    %125 = vmatpush1.bf16.msra.mxu0 %v104
    %126 = vmatprep.subr.bf16.mxu0 0
    %127 = vmatpush2.bf16.msra.mxu0 0
    %128 = vmatprep.subr.bf16.mxu0 0
    %129 = vmatpush2.bf16.msra.mxu0 0
    %130 = vmatprep.subr.bf16.mxu0 0
    %131 = vmatpush2.bf16.msra.mxu0 0
    %132 = vmatprep.subr.bf16.mxu0 0
    %133 = vmatpush2.bf16.msra.mxu0 0
    %134 = vmatprep.subr.bf16.mxu0 0
    %135 = vmatpush2.bf16.msra.mxu0 0
    %136 = vmatprep.subr.bf16.mxu0 0
    %137 = vmatpush2.bf16.msra.mxu0 0
    %138 = vmatprep.subr.bf16.mxu0 0
    %139 = vmatpush2.bf16.msra.mxu0 0
    %140 = vmatprep.subr.bf16.mxu0 0
    %141 = vmatpush2.bf16.msra.mxu0 0
    %142 = vmatprep.mubr.bf16.mxu0 0
    %143 = vmatmul.mubr.bf16.gmra.mxu0 %v108
    %v144 = vpop.f32.mrf.mxu0
    %v145 = vadd.f32 0.0, %v144
    %v146 = vpop.f32.mrf.mxu0
    %v147 = vpop.f32.mrf.mxu0
    %v148 = vpop.f32.mrf.mxu0
    %149 = vdwg.mxu0
    %v152 = vunpack.c.l.b16 %v86
    %v153 = vunpack.c.l.b16 %v87
    %v154 = vpack.c.b16 %v153, %v152
    %v157 = vsel %vm106, %v77, 0
    %159 = vmatprep.subr.bf16.mxu0 0
    %160 = vmatpush1.bf16.msra.mxu0 0
    %161 = vmatprep.subr.bf16.mxu0 0
    %162 = vmatpush1.bf16.msra.mxu0 0
    %163 = vmatprep.subr.bf16.mxu0 0
    %164 = vmatpush1.bf16.msra.mxu0 0
    %165 = vmatprep.subr.bf16.mxu0 0
    %166 = vmatpush1.bf16.msra.mxu0 0
    %167 = vmatprep.subr.bf16.mxu0 0
    %168 = vmatpush1.bf16.msra.mxu0 0
    %169 = vmatprep.subr.bf16.mxu0 0
    %170 = vmatpush1.bf16.msra.mxu0 0
    %171 = vmatprep.subr.bf16.mxu0 0
    %172 = vmatpush1.bf16.msra.mxu0 0
    %173 = vmatprep.subr.bf16.mxu0 0
    %174 = vmatpush1.bf16.msra.mxu0 %v154
    %175 = vmatprep.subr.bf16.mxu0 0
    %176 = vmatpush2.bf16.msra.mxu0 0
    %177 = vmatprep.subr.bf16.mxu0 0
    %178 = vmatpush2.bf16.msra.mxu0 0
    %179 = vmatprep.subr.bf16.mxu0 0
    %180 = vmatpush2.bf16.msra.mxu0 0
    %181 = vmatprep.subr.bf16.mxu0 0
    %182 = vmatpush2.bf16.msra.mxu0 0
    %183 = vmatprep.subr.bf16.mxu0 0
    %184 = vmatpush2.bf16.msra.mxu0 0
    %185 = vmatprep.subr.bf16.mxu0 0
    %186 = vmatpush2.bf16.msra.mxu0 0
    %187 = vmatprep.subr.bf16.mxu0 0
    %188 = vmatpush2.bf16.msra.mxu0 0
    %189 = vmatprep.subr.bf16.mxu0 0
    %190 = vmatpush2.bf16.msra.mxu0 0
    %191 = vmatprep.mubr.bf16.mxu0 0
    %192 = vmatmul.mubr.bf16.gmra.mxu0 %v157
    %v193 = vpop.f32.mrf.mxu0
    %v194 = vadd.f32 0.0, %v193
    %v195 = vpop.f32.mrf.mxu0
    %v196 = vpop.f32.mrf.mxu0
    %v197 = vpop.f32.mrf.mxu0
    %198 = vdwg.mxu0
    %v201 = vunpack.c.l.b16 %v88
    %v202 = vunpack.c.l.b16 %v89
    %v203 = vpack.c.b16 %v202, %v201
    %v206 = vsel %vm106, %v78, 0
    %208 = vmatprep.subr.bf16.mxu0 0
    %209 = vmatpush1.bf16.msra.mxu0 0
    %210 = vmatprep.subr.bf16.mxu0 0
    %211 = vmatpush1.bf16.msra.mxu0 0
    %212 = vmatprep.subr.bf16.mxu0 0
    %213 = vmatpush1.bf16.msra.mxu0 0
    %214 = vmatprep.subr.bf16.mxu0 0
    %215 = vmatpush1.bf16.msra.mxu0 0
    %216 = vmatprep.subr.bf16.mxu0 0
    %217 = vmatpush1.bf16.msra.mxu0 0
    %218 = vmatprep.subr.bf16.mxu0 0
    %219 = vmatpush1.bf16.msra.mxu0 0
    %220 = vmatprep.subr.bf16.mxu0 0
    %221 = vmatpush1.bf16.msra.mxu0 0
    %222 = vmatprep.subr.bf16.mxu0 0
    %223 = vmatpush1.bf16.msra.mxu0 %v203
    %224 = vmatprep.subr.bf16.mxu0 0
    %225 = vmatpush2.bf16.msra.mxu0 0
    %226 = vmatprep.subr.bf16.mxu0 0
    %227 = vmatpush2.bf16.msra.mxu0 0
    %228 = vmatprep.subr.bf16.mxu0 0
    %229 = vmatpush2.bf16.msra.mxu0 0
    %230 = vmatprep.subr.bf16.mxu0 0
    %231 = vmatpush2.bf16.msra.mxu0 0
    %232 = vmatprep.subr.bf16.mxu0 0
    %233 = vmatpush2.bf16.msra.mxu0 0
    %234 = vmatprep.subr.bf16.mxu0 0
    %235 = vmatpush2.bf16.msra.mxu0 0
    %236 = vmatprep.subr.bf16.mxu0 0
    %237 = vmatpush2.bf16.msra.mxu0 0
    %238 = vmatprep.subr.bf16.mxu0 0
    %239 = vmatpush2.bf16.msra.mxu0 0
    %240 = vmatprep.mubr.bf16.mxu0 0
    %241 = vmatmul.mubr.bf16.gmra.mxu0 %v206
    %v242 = vpop.f32.mrf.mxu0
    %v243 = vadd.f32 0.0, %v242
    %v244 = vpop.f32.mrf.mxu0
    %v245 = vpop.f32.mrf.mxu0
    %v246 = vpop.f32.mrf.mxu0
    %247 = vdwg.mxu0
    %v250 = vunpack.c.l.b16 %v90
    %v251 = vunpack.c.l.b16 %v91
    %v252 = vpack.c.b16 %v251, %v250
    %v255 = vsel %vm106, %v79, 0
    %257 = vmatprep.subr.bf16.mxu0 0
    %258 = vmatpush1.bf16.msra.mxu0 0
    %259 = vmatprep.subr.bf16.mxu0 0
    %260 = vmatpush1.bf16.msra.mxu0 0
    %261 = vmatprep.subr.bf16.mxu0 0
    %262 = vmatpush1.bf16.msra.mxu0 0
    %263 = vmatprep.subr.bf16.mxu0 0
    %264 = vmatpush1.bf16.msra.mxu0 0
    %265 = vmatprep.subr.bf16.mxu0 0
    %266 = vmatpush1.bf16.msra.mxu0 0
    %267 = vmatprep.subr.bf16.mxu0 0
    %268 = vmatpush1.bf16.msra.mxu0 0
    %269 = vmatprep.subr.bf16.mxu0 0
    %270 = vmatpush1.bf16.msra.mxu0 0
    %271 = vmatprep.subr.bf16.mxu0 0
    %272 = vmatpush1.bf16.msra.mxu0 %v252
    %273 = vmatprep.subr.bf16.mxu0 0
    %274 = vmatpush2.bf16.msra.mxu0 0
    %275 = vmatprep.subr.bf16.mxu0 0
    %276 = vmatpush2.bf16.msra.mxu0 0
    %277 = vmatprep.subr.bf16.mxu0 0
    %278 = vmatpush2.bf16.msra.mxu0 0
    %279 = vmatprep.subr.bf16.mxu0 0
    %280 = vmatpush2.bf16.msra.mxu0 0
    %281 = vmatprep.subr.bf16.mxu0 0
    %282 = vmatpush2.bf16.msra.mxu0 0
    %283 = vmatprep.subr.bf16.mxu0 0
    %284 = vmatpush2.bf16.msra.mxu0 0
    %285 = vmatprep.subr.bf16.mxu0 0
    %286 = vmatpush2.bf16.msra.mxu0 0
    %287 = vmatprep.subr.bf16.mxu0 0
    %288 = vmatpush2.bf16.msra.mxu0 0
    %289 = vmatprep.mubr.bf16.mxu0 0
    %290 = vmatmul.mubr.bf16.gmra.mxu0 %v255
    %v291 = vpop.f32.mrf.mxu0
    %v292 = vadd.f32 0.0, %v291
    %v293 = vpop.f32.mrf.mxu0
    %v294 = vpop.f32.mrf.mxu0
    %v295 = vpop.f32.mrf.mxu0
    %296 = vdwg.mxu0
    %v299 = vunpack.c.l.b16 %v92
    %v300 = vunpack.c.l.b16 %v93
    %v301 = vpack.c.b16 %v300, %v299
    %v304 = vsel %vm106, %v80, 0
    %306 = vmatprep.subr.bf16.mxu0 0
    %307 = vmatpush1.bf16.msra.mxu0 0
    %308 = vmatprep.subr.bf16.mxu0 0
    %309 = vmatpush1.bf16.msra.mxu0 0
    %310 = vmatprep.subr.bf16.mxu0 0
    %311 = vmatpush1.bf16.msra.mxu0 0
    %312 = vmatprep.subr.bf16.mxu0 0
    %313 = vmatpush1.bf16.msra.mxu0 0
    %314 = vmatprep.subr.bf16.mxu0 0
    %315 = vmatpush1.bf16.msra.mxu0 0
    %316 = vmatprep.subr.bf16.mxu0 0
    %317 = vmatpush1.bf16.msra.mxu0 0
    %318 = vmatprep.subr.bf16.mxu0 0
    %319 = vmatpush1.bf16.msra.mxu0 0
    %320 = vmatprep.subr.bf16.mxu0 0
    %321 = vmatpush1.bf16.msra.mxu0 %v301
    %322 = vmatprep.subr.bf16.mxu0 0
    %323 = vmatpush2.bf16.msra.mxu0 0
    %324 = vmatprep.subr.bf16.mxu0 0
    %325 = vmatpush2.bf16.msra.mxu0 0
    %326 = vmatprep.subr.bf16.mxu0 0
    %327 = vmatpush2.bf16.msra.mxu0 0
    %328 = vmatprep.subr.bf16.mxu0 0
    %329 = vmatpush2.bf16.msra.mxu0 0
    %330 = vmatprep.subr.bf16.mxu0 0
    %331 = vmatpush2.bf16.msra.mxu0 0
    %332 = vmatprep.subr.bf16.mxu0 0
    %333 = vmatpush2.bf16.msra.mxu0 0
    %334 = vmatprep.subr.bf16.mxu0 0
    %335 = vmatpush2.bf16.msra.mxu0 0
    %336 = vmatprep.subr.bf16.mxu0 0
    %337 = vmatpush2.bf16.msra.mxu0 0
    %338 = vmatprep.mubr.bf16.mxu0 0
    %339 = vmatmul.mubr.bf16.gmra.mxu0 %v304
    %v340 = vpop.f32.mrf.mxu0
    %v341 = vadd.f32 0.0, %v340
    %v342 = vpop.f32.mrf.mxu0
    %v343 = vpop.f32.mrf.mxu0
    %v344 = vpop.f32.mrf.mxu0
    %345 = vdwg.mxu0
    %v348 = vunpack.c.l.b16 %v94
    %v349 = vunpack.c.l.b16 %v95
    %v350 = vpack.c.b16 %v349, %v348
    %v353 = vsel %vm106, %v81, 0
    %355 = vmatprep.subr.bf16.mxu0 0
    %356 = vmatpush1.bf16.msra.mxu0 0
    %357 = vmatprep.subr.bf16.mxu0 0
    %358 = vmatpush1.bf16.msra.mxu0 0
    %359 = vmatprep.subr.bf16.mxu0 0
    %360 = vmatpush1.bf16.msra.mxu0 0
    %361 = vmatprep.subr.bf16.mxu0 0
    %362 = vmatpush1.bf16.msra.mxu0 0
    %363 = vmatprep.subr.bf16.mxu0 0
    %364 = vmatpush1.bf16.msra.mxu0 0
    %365 = vmatprep.subr.bf16.mxu0 0
    %366 = vmatpush1.bf16.msra.mxu0 0
    %367 = vmatprep.subr.bf16.mxu0 0
    %368 = vmatpush1.bf16.msra.mxu0 0
    %369 = vmatprep.subr.bf16.mxu0 0
    %370 = vmatpush1.bf16.msra.mxu0 %v350
    %371 = vmatprep.subr.bf16.mxu0 0
    %372 = vmatpush2.bf16.msra.mxu0 0
    %373 = vmatprep.subr.bf16.mxu0 0
    %374 = vmatpush2.bf16.msra.mxu0 0
    %375 = vmatprep.subr.bf16.mxu0 0
    %376 = vmatpush2.bf16.msra.mxu0 0
    %377 = vmatprep.subr.bf16.mxu0 0
    %378 = vmatpush2.bf16.msra.mxu0 0
    %379 = vmatprep.subr.bf16.mxu0 0
    %380 = vmatpush2.bf16.msra.mxu0 0
    %381 = vmatprep.subr.bf16.mxu0 0
    %382 = vmatpush2.bf16.msra.mxu0 0
    %383 = vmatprep.subr.bf16.mxu0 0
    %384 = vmatpush2.bf16.msra.mxu0 0
    %385 = vmatprep.subr.bf16.mxu0 0
    %386 = vmatpush2.bf16.msra.mxu0 0
    %387 = vmatprep.mubr.bf16.mxu0 0
    %388 = vmatmul.mubr.bf16.gmra.mxu0 %v353
    %v389 = vpop.f32.mrf.mxu0
    %v390 = vadd.f32 0.0, %v389
    %v391 = vpop.f32.mrf.mxu0
    %v392 = vpop.f32.mrf.mxu0
    %v393 = vpop.f32.mrf.mxu0
    %394 = vdwg.mxu0
    %v397 = vunpack.c.l.b16 %v96
    %v398 = vunpack.c.l.b16 %v97
    %v399 = vpack.c.b16 %v398, %v397
    %v402 = vsel %vm106, %v82, 0
    %404 = vmatprep.subr.bf16.mxu0 0
    %405 = vmatpush1.bf16.msra.mxu0 0
    %406 = vmatprep.subr.bf16.mxu0 0
    %407 = vmatpush1.bf16.msra.mxu0 0
    %408 = vmatprep.subr.bf16.mxu0 0
    %409 = vmatpush1.bf16.msra.mxu0 0
    %410 = vmatprep.subr.bf16.mxu0 0
    %411 = vmatpush1.bf16.msra.mxu0 0
    %412 = vmatprep.subr.bf16.mxu0 0
    %413 = vmatpush1.bf16.msra.mxu0 0
    %414 = vmatprep.subr.bf16.mxu0 0
    %415 = vmatpush1.bf16.msra.mxu0 0
    %416 = vmatprep.subr.bf16.mxu0 0
    %417 = vmatpush1.bf16.msra.mxu0 0
    %418 = vmatprep.subr.bf16.mxu0 0
    %419 = vmatpush1.bf16.msra.mxu0 %v399
    %420 = vmatprep.subr.bf16.mxu0 0
    %421 = vmatpush2.bf16.msra.mxu0 0
    %422 = vmatprep.subr.bf16.mxu0 0
    %423 = vmatpush2.bf16.msra.mxu0 0
    %424 = vmatprep.subr.bf16.mxu0 0
    %425 = vmatpush2.bf16.msra.mxu0 0
    %426 = vmatprep.subr.bf16.mxu0 0
    %427 = vmatpush2.bf16.msra.mxu0 0
    %428 = vmatprep.subr.bf16.mxu0 0
    %429 = vmatpush2.bf16.msra.mxu0 0
    %430 = vmatprep.subr.bf16.mxu0 0
    %431 = vmatpush2.bf16.msra.mxu0 0
    %432 = vmatprep.subr.bf16.mxu0 0
    %433 = vmatpush2.bf16.msra.mxu0 0
    %434 = vmatprep.subr.bf16.mxu0 0
    %435 = vmatpush2.bf16.msra.mxu0 0
    %436 = vmatprep.mubr.bf16.mxu0 0
    %437 = vmatmul.mubr.bf16.gmra.mxu0 %v402
    %v438 = vpop.f32.mrf.mxu0
    %v439 = vadd.f32 0.0, %v438
    %v440 = vpop.f32.mrf.mxu0
    %v441 = vpop.f32.mrf.mxu0
    %v442 = vpop.f32.mrf.mxu0
    %443 = vdwg.mxu0
    %v446 = vunpack.c.l.b16 %v98
    %v447 = vunpack.c.l.b16 %v99
    %v448 = vpack.c.b16 %v447, %v446
    %v451 = vsel %vm106, %v83, 0
    %453 = vmatprep.subr.bf16.mxu0 0
    %454 = vmatpush1.bf16.msra.mxu0 0
    %455 = vmatprep.subr.bf16.mxu0 0
    %456 = vmatpush1.bf16.msra.mxu0 0
    %457 = vmatprep.subr.bf16.mxu0 0
    %458 = vmatpush1.bf16.msra.mxu0 0
    %459 = vmatprep.subr.bf16.mxu0 0
    %460 = vmatpush1.bf16.msra.mxu0 0
    %461 = vmatprep.subr.bf16.mxu0 0
    %462 = vmatpush1.bf16.msra.mxu0 0
    %463 = vmatprep.subr.bf16.mxu0 0
    %464 = vmatpush1.bf16.msra.mxu0 0
    %465 = vmatprep.subr.bf16.mxu0 0
    %466 = vmatpush1.bf16.msra.mxu0 0
    %467 = vmatprep.subr.bf16.mxu0 0
    %468 = vmatpush1.bf16.msra.mxu0 %v448
    %469 = vmatprep.subr.bf16.mxu0 0
    %470 = vmatpush2.bf16.msra.mxu0 0
    %471 = vmatprep.subr.bf16.mxu0 0
    %472 = vmatpush2.bf16.msra.mxu0 0
    %473 = vmatprep.subr.bf16.mxu0 0
    %474 = vmatpush2.bf16.msra.mxu0 0
    %475 = vmatprep.subr.bf16.mxu0 0
    %476 = vmatpush2.bf16.msra.mxu0 0
    %477 = vmatprep.subr.bf16.mxu0 0
    %478 = vmatpush2.bf16.msra.mxu0 0
    %479 = vmatprep.subr.bf16.mxu0 0
    %480 = vmatpush2.bf16.msra.mxu0 0
    %481 = vmatprep.subr.bf16.mxu0 0
    %482 = vmatpush2.bf16.msra.mxu0 0
    %483 = vmatprep.subr.bf16.mxu0 0
    %484 = vmatpush2.bf16.msra.mxu0 0
    %485 = vmatprep.mubr.bf16.mxu0 0
    %486 = vmatmul.mubr.bf16.gmra.mxu0 %v451
    %v487 = vpop.f32.mrf.mxu0
    %v488 = vadd.f32 0.0, %v487
    %v489 = vpop.f32.mrf.mxu0
    %v490 = vpop.f32.mrf.mxu0
    %v491 = vpop.f32.mrf.mxu0
    %492 = vdwg.mxu0
    %v493 = vadd.f32 %v68, %v145
    %v494 = vadd.f32 %v69, %v194
    %v495 = vadd.f32 %v70, %v243
    %v496 = vadd.f32 %v71, %v292
    %v497 = vadd.f32 %v72, %v341
    %v498 = vadd.f32 %v73, %v390
    %v499 = vadd.f32 %v74, %v439
    %v500 = vadd.f32 %v75, %v488
    %501 = vst [vmem:[#allocation2] sm:$0x1] %v493
    %502 = vst [vmem:[#allocation2 + $0x1] sm:$0x1] %v494
    %503 = vst [vmem:[#allocation2 + $0x2] sm:$0x1] %v495
    %504 = vst [vmem:[#allocation2 + $0x3] sm:$0x1] %v496
    %505 = vst [vmem:[#allocation2 + $0x4] sm:$0x1] %v497
    %506 = vst [vmem:[#allocation2 + $0x5] sm:$0x1] %v498
    %507 = vst [vmem:[#allocation2 + $0x6] sm:$0x1] %v499
    %508 = vst [vmem:[#allocation2 + $0x7] sm:$0x1] %v500
    // Predicated region
    $region38: #{tpu_custom_call.1} parent=1 // pred_check
      %p509 = pneg %p56
    $region39: #{tpu_custom_call.1} parent=1 // pred_check_branch
      %511 = sbr.rel (%p509) target = $region41
    $region40: #{tpu_custom_call.1} parent=1 // pred_region
      %v512 = vld [vmem:[#allocation2] sm:$0x1]
      %v513 = vld [vmem:[#allocation2 + $0x1] sm:$0x1]
      %v514 = vld [vmem:[#allocation2 + $0x2] sm:$0x1]
      %v515 = vld [vmem:[#allocation2 + $0x3] sm:$0x1]
      %v516 = vld [vmem:[#allocation2 + $0x4] sm:$0x1]
      %v517 = vld [vmem:[#allocation2 + $0x5] sm:$0x1]
      %v518 = vld [vmem:[#allocation2 + $0x6] sm:$0x1]
      %v519 = vld [vmem:[#allocation2 + $0x7] sm:$0x1]
      %v520 = vld [vmem:[%s2] sm:$0xff]
      %522 = vset.pattern.permute.xlu0 0
      %523 = vperm.xlu0 %522, %v520
      %v524 = vpop.permute.xlu0 %523
      %v525 = vlaneseq
      %v526 = vshrl.u32 %v525, 7
      %v527 = vsub.s32 0, %v526
      %v528 = vrot.slane %v524, %v527
      %v529 = vlaneseq
      %v530 = vshrl.u32 %v529, 7
      %v531 = vsub.s32 1, %v530
      %v532 = vrot.slane %v524, %v531
      %v533 = vlaneseq
      %v534 = vshrl.u32 %v533, 7
      %v535 = vsub.s32 2, %v534
      %v536 = vrot.slane %v524, %v535
      %v537 = vlaneseq
      %v538 = vshrl.u32 %v537, 7
      %v539 = vsub.s32 3, %v538
      %v540 = vrot.slane %v524, %v539
      %v541 = vlaneseq
      %v542 = vshrl.u32 %v541, 7
      %v543 = vsub.s32 4, %v542
      %v544 = vrot.slane %v524, %v543
      %v545 = vlaneseq
      %v546 = vshrl.u32 %v545, 7
      %v547 = vsub.s32 5, %v546
      %v548 = vrot.slane %v524, %v547
      %v549 = vlaneseq
      %v550 = vshrl.u32 %v549, 7
      %v551 = vsub.s32 6, %v550
      %v552 = vrot.slane %v524, %v551
      %v553 = vlaneseq
      %v554 = vshrl.u32 %v553, 7
      %v555 = vsub.s32 7, %v554
      %v556 = vrot.slane %v524, %v555
      %v565 = vrcp.pop %v528
      %v566 = vmul.f32 %v512, %v565
      %v567 = vrcp.pop %v532
      %v568 = vmul.f32 %v513, %v567
      %v569 = vrcp.pop %v536
      %v570 = vmul.f32 %v514, %v569
      %v571 = vrcp.pop %v540
      %v572 = vmul.f32 %v515, %v571
      %v573 = vrcp.pop %v544
      %v574 = vmul.f32 %v516, %v573
      %v575 = vrcp.pop %v548
      %v576 = vmul.f32 %v517, %v575
      %v577 = vrcp.pop %v552
      %v578 = vmul.f32 %v518, %v577
      %v579 = vrcp.pop %v556
      %v580 = vmul.f32 %v519, %v579
      %v589 = vcombine.low %v566, %v568
      %v590 = vcombine.low %v570, %v572
      %v591 = vcombine.low %v574, %v576
      %v592 = vcombine.low %v578, %v580
      %v594 = vunpack.c.l.s4 1966171168
      %v595 = vunpack.c.0.s8 %v594
      %v596 = vlaneseq
      %v597 = vshrl.u32 %v596, 7
      %v598 = vsub.s32 %v595, %v597
      %v599 = vrot.slane %v589, %v598
      %v601 = vunpack.c.l.s4 1966171168
      %v602 = vunpack.c.0.s8 %v601
      %v603 = vlaneseq
      %v604 = vshrl.u32 %v603, 7
      %v605 = vsub.s32 %v602, %v604
      %v606 = vrot.slane %v590, %v605
      %v608 = vunpack.c.l.s4 1966171168
      %v609 = vunpack.c.0.s8 %v608
      %v610 = vlaneseq
      %v611 = vshrl.u32 %v610, 7
      %v612 = vsub.s32 %v609, %v611
      %v613 = vrot.slane %v591, %v612
      %v615 = vunpack.c.l.s4 1966171168
      %v616 = vunpack.c.0.s8 %v615
      %v617 = vlaneseq
      %v618 = vshrl.u32 %v617, 7
      %v619 = vsub.s32 %v616, %v618
      %v620 = vrot.slane %v592, %v619
      %v621 = vcombine.low %v599, %v606
      %v622 = vcombine.low %v613, %v620
      %v624 = vunpack.c.l.s4 1966171168
      %v625 = vunpack.c.0.s8 %v624
      %v626 = vlaneseq
      %v627 = vshrl.u32 %v626, 7
      %v628 = vsub.s32 %v625, %v627
      %v629 = vrot.slane %v621, %v628
      %v631 = vunpack.c.l.s4 1966171168
      %v632 = vunpack.c.0.s8 %v631
      %v633 = vlaneseq
      %v634 = vshrl.u32 %v633, 7
      %v635 = vsub.s32 %v632, %v634
      %v636 = vrot.slane %v622, %v635
      %v637 = vcombine.low %v629, %v636
      %639 = vst [vmem:[#allocation8] sm:$0xff] %v637
      %v640 = vld [vmem:[#allocation6] sm:$0xff]
      %v641 = vld [vmem:[#allocation6 + $0x8] sm:$0xff]
      %v642 = vld [vmem:[#allocation6 + $0x10] sm:$0xff]
      %v643 = vld [vmem:[#allocation6 + $0x18] sm:$0xff]
      %v644 = vld [vmem:[#allocation6 + $0x20] sm:$0xff]
      %v645 = vld [vmem:[#allocation6 + $0x28] sm:$0xff]
      %v646 = vld [vmem:[#allocation6 + $0x30] sm:$0xff]
      %v647 = vld [vmem:[#allocation6 + $0x38] sm:$0xff]
      %v648 = vld [vmem:[#allocation6 + $0x40] sm:$0xff]
      %v649 = vld [vmem:[#allocation6 + $0x48] sm:$0xff]
      %v650 = vld [vmem:[#allocation6 + $0x50] sm:$0xff]
      %v651 = vld [vmem:[#allocation6 + $0x58] sm:$0xff]
      %v652 = vld [vmem:[#allocation6 + $0x60] sm:$0xff]
      %v653 = vld [vmem:[#allocation6 + $0x68] sm:$0xff]
      %v654 = vld [vmem:[#allocation6 + $0x70] sm:$0xff]
      %v655 = vld [vmem:[#allocation6 + $0x78] sm:$0xff]
      %v656 = vld [vmem:[%s3] sm:$0xff]
      %657 = vmatprep.subr.mxu0 0.0
      %658 = vmatpush1.msra.mxu0 %v655
      %659 = vmatprep.subr.mxu0 0.0
      %660 = vmatpush1.msra.mxu0 %v654
      %661 = vmatprep.subr.mxu0 0.0
      %662 = vmatpush1.msra.mxu0 %v653
      %663 = vmatprep.subr.mxu0 0.0
      %664 = vmatpush1.msra.mxu0 %v652
      %665 = vmatprep.subr.mxu0 0.0
      %666 = vmatpush1.msra.mxu0 %v651
      %667 = vmatprep.subr.mxu0 0.0
      %668 = vmatpush1.msra.mxu0 %v650
      %669 = vmatprep.subr.mxu0 0.0
      %670 = vmatpush1.msra.mxu0 %v649
      %671 = vmatprep.subr.mxu0 0.0
      %672 = vmatpush1.msra.mxu0 %v648
      %673 = vmatprep.subr.mxu0 0.0
      %674 = vmatpush1.msra.mxu0 %v647
      %675 = vmatprep.subr.mxu0 0.0
      %676 = vmatpush1.msra.mxu0 %v646
      %677 = vmatprep.subr.mxu0 0.0
      %678 = vmatpush1.msra.mxu0 %v645
      %679 = vmatprep.subr.mxu0 0.0
      %680 = vmatpush1.msra.mxu0 %v644
      %681 = vmatprep.subr.mxu0 0.0
      %682 = vmatpush1.msra.mxu0 %v643
      %683 = vmatprep.subr.mxu0 0.0
      %684 = vmatpush1.msra.mxu0 %v642
      %685 = vmatprep.subr.mxu0 0.0
      %686 = vmatpush1.msra.mxu0 %v641
      %687 = vmatprep.subr.mxu0 0.0
      %688 = vmatpush1.msra.mxu0 %v640
      %689 = vmatprep.subr.mxu0 0.0
      %690 = vmatpush2.msra.mxu0 0.0
      %691 = vmatprep.subr.mxu0 0.0
      %692 = vmatpush2.msra.mxu0 0.0
      %693 = vmatprep.subr.mxu0 0.0
      %694 = vmatpush2.msra.mxu0 0.0
      %695 = vmatprep.subr.mxu0 0.0
      %696 = vmatpush2.msra.mxu0 0.0
      %697 = vmatprep.subr.mxu0 0.0
      %698 = vmatpush2.msra.mxu0 0.0
      %699 = vmatprep.subr.mxu0 0.0
      %700 = vmatpush2.msra.mxu0 0.0
      %701 = vmatprep.subr.mxu0 0.0
      %702 = vmatpush2.msra.mxu0 0.0
      %703 = vmatprep.subr.mxu0 0.0
      %704 = vmatpush2.msra.mxu0 0.0
      %705 = vmatprep.subr.mxu0 0.0
      %706 = vmatpush2.msra.mxu0 0.0
      %707 = vmatprep.subr.mxu0 0.0
      %708 = vmatpush2.msra.mxu0 0.0
      %709 = vmatprep.subr.mxu0 0.0
      %710 = vmatpush2.msra.mxu0 0.0
      %711 = vmatprep.subr.mxu0 0.0
      %712 = vmatpush2.msra.mxu0 0.0
      %713 = vmatprep.subr.mxu0 0.0
      %714 = vmatpush2.msra.mxu0 0.0
      %715 = vmatprep.subr.mxu0 0.0
      %716 = vmatpush2.msra.mxu0 0.0
      %717 = vmatprep.subr.mxu0 0.0
      %718 = vmatpush2.msra.mxu0 0.0
      %719 = vmatprep.subr.mxu0 0.0
      %720 = vmatpush2.msra.mxu0 0.0
      %721 = vmatprep.mubr.f32.mxu0 0.0
      %722 = vmatmul.mubr.f32.gmra.mxu0 %v637
      %v723 = vpop.f32.mrf.mxu0
      %v724 = vadd.f32 0.0, %v723
      %v725 = vpop.f32.mrf.mxu0
      %726 = vdwg.mxu0
      %v727 = vmul.f32 %v724, %v637
      %728 = vadd.xlane.f32.xlu0 %v727
      %v729 = vpop.xlane.xlu0 %728
      %730 = vmatprep.subr.mxu0 0.0
      %731 = vmatpush1.xpose.msra.mxu0 0.0
      %732 = vmatprep.subr.mxu0 0.0
      %733 = vmatpush1.xpose.msra.mxu0 0.0
      %734 = vmatprep.subr.mxu0 0.0
      %735 = vmatpush1.xpose.msra.mxu0 0.0
      %736 = vmatprep.subr.mxu0 0.0
      %737 = vmatpush1.xpose.msra.mxu0 0.0
      %738 = vmatprep.subr.mxu0 0.0
      %739 = vmatpush1.xpose.msra.mxu0 0.0
      %740 = vmatprep.subr.mxu0 0.0
      %741 = vmatpush1.xpose.msra.mxu0 0.0
      %742 = vmatprep.subr.mxu0 0.0
      %743 = vmatpush1.xpose.msra.mxu0 0.0
      %744 = vmatprep.subr.mxu0 0.0
      %745 = vmatpush1.xpose.msra.mxu0 0.0
      %746 = vmatprep.subr.mxu0 0.0
      %747 = vmatpush1.xpose.msra.mxu0 0.0
      %748 = vmatprep.subr.mxu0 0.0
      %749 = vmatpush1.xpose.msra.mxu0 0.0
      %750 = vmatprep.subr.mxu0 0.0
      %751 = vmatpush1.xpose.msra.mxu0 0.0
      %752 = vmatprep.subr.mxu0 0.0
      %753 = vmatpush1.xpose.msra.mxu0 0.0
      %754 = vmatprep.subr.mxu0 0.0
      %755 = vmatpush1.xpose.msra.mxu0 0.0
      %756 = vmatprep.subr.mxu0 0.0
      %757 = vmatpush1.xpose.msra.mxu0 0.0
      %758 = vmatprep.subr.mxu0 0.0
      %759 = vmatpush1.xpose.msra.mxu0 0.0
      %760 = vmatprep.subr.mxu0 0.0
      %761 = vmatpush1.xpose.msra.mxu0 %v656
      %762 = vmatprep.subr.mxu0 0.0
      %763 = vmatpush2.xpose.msra.mxu0 0.0
      %764 = vmatprep.subr.mxu0 0.0
      %765 = vmatpush2.xpose.msra.mxu0 0.0
      %766 = vmatprep.subr.mxu0 0.0
      %767 = vmatpush2.xpose.msra.mxu0 0.0
      %768 = vmatprep.subr.mxu0 0.0
      %769 = vmatpush2.xpose.msra.mxu0 0.0
      %770 = vmatprep.subr.mxu0 0.0
      %771 = vmatpush2.xpose.msra.mxu0 0.0
      %772 = vmatprep.subr.mxu0 0.0
      %773 = vmatpush2.xpose.msra.mxu0 0.0
      %774 = vmatprep.subr.mxu0 0.0
      %775 = vmatpush2.xpose.msra.mxu0 0.0
      %776 = vmatprep.subr.mxu0 0.0
      %777 = vmatpush2.xpose.msra.mxu0 0.0
      %778 = vmatprep.subr.mxu0 0.0
      %779 = vmatpush2.xpose.msra.mxu0 0.0
      %780 = vmatprep.subr.mxu0 0.0
      %781 = vmatpush2.xpose.msra.mxu0 0.0
      %782 = vmatprep.subr.mxu0 0.0
      %783 = vmatpush2.xpose.msra.mxu0 0.0
      %784 = vmatprep.subr.mxu0 0.0
      %785 = vmatpush2.xpose.msra.mxu0 0.0
      %786 = vmatprep.subr.mxu0 0.0
      %787 = vmatpush2.xpose.msra.mxu0 0.0
      %788 = vmatprep.subr.mxu0 0.0
      %789 = vmatpush2.xpose.msra.mxu0 0.0
      %790 = vmatprep.subr.mxu0 0.0
      %791 = vmatpush2.xpose.msra.mxu0 0.0
      %792 = vmatprep.subr.mxu0 0.0
      %793 = vmatpush2.xpose.msra.mxu0 0.0
      %794 = vmatprep.mubr.f32.mxu0 0.0
      %795 = vmatmul.mubr.f32.gmra.mxu0 %v724
      %v796 = vpop.f32.mrf.mxu0
      %v797 = vadd.f32 0.0, %v796
      %v798 = vpop.f32.mrf.mxu0
      %799 = vdwg.mxu0
      %v800 = vld [vmem:[%s5] sm:$0x1]
      %v802 = vlaneseq
      %v803 = vshrl.u32 %v802, 7
      %v804 = vsub.s32 0, %v803
      %v805 = vrot.slane %v800, %v804
      %v807 = vadd.f32 %v805, %v729
      %v808 = vmul.f32 %v797, 2.0
      %v809 = vsub.f32 %v807, %v808
      %vm810 = vcmask 64512
      %811 = vst.msk [vmem:[#allocation9] sm:$0xff] %vm810, %v809
    $region41: #{tpu_custom_call.1} parent=1 // pred_fallthru
      _
    // Predicated region
    $region42: #{tpu_custom_call.1} parent=1 // pred_check
      _
    $region43: #{tpu_custom_call.1} parent=1 // pred_check_branch
      %813 = sbr.rel (0) target = $region45
    $region44: #{tpu_custom_call.1} parent=1 // pred_region
      %s815 = ssub.s32 128, 128
      %816 = vsyncadd [#allocation5], %s815
      %s818 = sshll.u32 [#allocation8], 4
      %s819 = int_to_ptr.vmem [resolvable:$true] %s818
      %821 = dma.vmem_to_hbm [thread:$0]  %s819, 128, %s6, [#allocation5]
    $region45: #{tpu_custom_call.1} parent=1 // pred_fallthru
      _
    // Predicated region
    $region46: #{tpu_custom_call.1} parent=1 // pred_check
      _
    $region47: #{tpu_custom_call.1} parent=1 // pred_check_branch
      %823 = sbr.rel (0) target = $region49
    $region48: #{tpu_custom_call.1} parent=1 // pred_region
      %s825 = ssub.s32 128, 128
      %826 = vsyncadd [#allocation10], %s825
      %s828 = sshll.u32 [#allocation9], 4
      %s829 = int_to_ptr.vmem [resolvable:$true] %s828
      %831 = dma.vmem_to_hbm [thread:$0]  %s829, 128, %s7, [#allocation10]
    $region49: #{tpu_custom_call.1} parent=1 // pred_fallthru
      _
    // Predicated region
    $region50: #{tpu_custom_call.1} parent=1 // pred_check
      _
    $region51: #{tpu_custom_call.1} parent=1 // pred_check_branch
      %833 = sbr.rel (0) target = $region53
    $region52: #{tpu_custom_call.1} parent=1 // pred_region
      %834 = dma.done [#allocation5], 128
    $region53: #{tpu_custom_call.1} parent=1 // pred_fallthru
      _
    // Predicated region
    $region54: #{tpu_custom_call.1} parent=1 // pred_check
      _
    $region55: #{tpu_custom_call.1} parent=1 // pred_check_branch
      %836 = sbr.rel (0) target = $region57
    $region56: #{tpu_custom_call.1} parent=1 // pred_region
      %837 = dma.done [#allocation10], 128
    $region57: #{tpu_custom_call.1} parent=1 // pred_fallthru
      _
    %838 = vsyncpa [#allocation4], 1
    %839 = vsyncpa [#allocation7], 1
    %840 = vsyncpa [#allocation5], 1
    %841 = vsyncpa [#allocation10], 1

</llo_original>
